<compile_context>
chip_gen: v7x
topology: tpu7x:2x2x1
jax: 0.10.0
libtpu: 0.0.40
codegen_flags: <defaults>
</compile_context>

<pallas_src>
import functools

import jax
import jax.numpy as jnp
from jax import lax
from jax.experimental import pallas as pl
from jax.experimental.pallas import tpu as pltpu


_LANE = 128
_SUBLANE = 8


def _round_up(x, m):
    return ((x + m - 1) // m) * m


@functools.lru_cache(maxsize=None)
def _vmem_capacity_bytes():
    """Physical VMEM per TensorCore; conservative fallback is v7x's 64 MiB."""
    try:
        return int(pltpu.get_tpu_info().vmem_capacity_bytes)
    except Exception:  # noqa: BLE001 - info query is best-effort
        return 64 * 1024 * 1024


def _plan(B, D, out_dim, x_itemsize, out_itemsize, batch_tile, bf16_compute):
    """Pick (tile, num_tiles, vmem_limit_bytes) from the batch size and VMEM budget."""
    cap = _vmem_capacity_bytes()
    tile_budget = int(cap * 0.70)      # what the windows + intermediates may use
    vmem_limit = int(cap * 0.85)       # compiler limit, leaves slack above our estimate

    lanes_x = _round_up(D, _LANE)      # narrow last dims are lane-padded to 128 in VMEM
    # Per-batch-row VMEM cost (bytes):
    #   x window, double-buffered, lane-padded ............. 2 * lanes_x * x_itemsize
    #   h1 (tile, 64) f32 intermediate, lane-padded ......... 128 * 4
    #   h2 (tile, 32) f32 intermediate, lane-padded ......... 128 * 4
    #   one extra f32 temp (relu / reuse slack) ............. 128 * 4
    #   bf16 cast copies of x/h1/h2 (only if casting) ....... 3 * 128 * 2
    #   output window (out_dim, tile), double-buffered ...... 2 * round_up(out_dim, 8) * out_itemsize
    per_row = (2 * lanes_x * x_itemsize
               + 3 * _LANE * 4
               + (3 * _LANE * 2 if bf16_compute else 0)
               + 2 * _round_up(out_dim, _SUBLANE) * out_itemsize)
    max_tile = max(_LANE, (tile_budget // per_row) // _LANE * _LANE)

    tile = min(max(_LANE, _round_up(batch_tile, _LANE)), max_tile)
    if B <= tile:
        # Single grid step: the block covers the whole (sublane-padded) batch.
        return _round_up(max(B, 1), _SUBLANE), 1, vmem_limit

    num_tiles = -(-B // tile)
    if num_tiles % 2:
        # Keep the parallel grid even so v7x's two TensorCores split the steps evenly.
        # Same total work on single-TC v5e/v6e (perf-neutral there).
        num_tiles += 1
        tile = _round_up(-(-B // num_tiles), _LANE)
        num_tiles = -(-B // tile)
    return tile, num_tiles, vmem_limit


def _mlp_kernel(x_ref, w1_ref, b1_ref, w2_ref, b2_ref, w3t_ref, b3t_ref, o_ref):
    # Entire hot path (3 matmuls + bias + ReLU) runs in-kernel on the MXU/VPU.
    # Matmuls accumulate in f32; bias add + ReLU are f32. The optional bf16 cast of the
    # activations happens here (no extra HBM pass in the wrapper).
    cd = w1_ref.dtype
    x = x_ref[...].astype(cd)
    h1 = jnp.dot(x, w1_ref[...], preferred_element_type=jnp.float32) + b1_ref[...]
    h1 = jnp.maximum(h1, 0.0)
    h2 = jnp.dot(h1.astype(cd), w2_ref[...], preferred_element_type=jnp.float32) + b2_ref[...]
    h2 = jnp.maximum(h2, 0.0)
    # Final layer computed transposed -> (out_dim, tile). This keeps the output block
    # lane-dense (unmasked vst stores, tiny output VMEM window) instead of a (tile, 1)
    # block that would be lane-padded 128x and stored with tile/8 masked vst.msk ops.
    y_t = lax.dot_general(
        w3t_ref[...], h2.astype(cd),
        dimension_numbers=(((1,), (1,)), ((), ())),   # contract the 32-feature dim
        preferred_element_type=jnp.float32,
    ) + b3t_ref[...]
    o_ref[...] = y_t.astype(o_ref.dtype)


@functools.partial(jax.jit,
                   static_argnames=("tile", "num_tiles", "vmem_limit", "compute_dtype"))
def _forward(x, params, *, tile, num_tiles, vmem_limit, compute_dtype):
    w1, b1, w2, b2, w3, b3 = params
    B, D = x.shape
    out_dim = w3.shape[1]
    out_dtype = x.dtype

    if compute_dtype is not None:
        # Weights are tiny; casting them in the wrapper is free. x is cast in-kernel.
        w1, w2, w3 = (w.astype(compute_dtype) for w in (w1, w2, w3))
    b1, b2, b3 = (b.astype(jnp.float32) for b in (b1, b2, b3))
    w3t = w3.T            # (out_dim, 32)  - tiny
    b3t = b3.T            # (out_dim, 1)

    B_out = num_tiles * tile   # output padded to whole tiles; sliced in the wrapper

    # Advisory cost estimate (unpadded sizes) so XLA schedules this mem-bound call sensibly.
    flops = 2 * B * (D * 64 + 64 * 32 + 32 * out_dim)
    bytes_accessed = (x.size * x.dtype.itemsize
                      + sum(a.size * a.dtype.itemsize
                            for a in (w1, b1, w2, b2, w3t, b3t))
                      + B * out_dim * jnp.dtype(out_dtype).itemsize)

    def resident(arr):
        # Whole array as one block, constant block index -> stays VMEM-resident across
        # grid steps (no per-step re-DMA).
        zeros = (0,) * arr.ndim
        return pl.BlockSpec(arr.shape, lambda i, z=zeros: z)

    out_t = pl.pallas_call(
        _mlp_kernel,
        out_shape=jax.ShapeDtypeStruct((out_dim, B_out), out_dtype),
        grid_spec=pl.GridSpec(
            grid=(num_tiles,),
            in_specs=[
                # x tile: rows on sublanes, features on lanes. The last block may read
                # past B (ceil-div grid); those rows are unspecified and their outputs
                # are sliced off below — no wrapper-side jnp.pad copy of x.
                pl.BlockSpec((tile, D), lambda i: (i, 0)),
                resident(w1), resident(b1),
                resident(w2), resident(b2),
                resident(w3t), resident(b3t),
            ],
            out_specs=pl.BlockSpec((out_dim, tile), lambda i: (0, i)),  # lane-dense
        ),
        compiler_params=pltpu.CompilerParams(
            dimension_semantics=("parallel",),
            vmem_limit_bytes=vmem_limit,
        ),
        cost_estimate=pl.CostEstimate(flops=flops, transcendentals=0,
                                      bytes_accessed=bytes_accessed),
    )(x, w1, b1, w2, b2, w3t, b3t)

    # Tiny (out_dim, B) -> (B, out_dim); negligible vs the x read (D >= 32).
    return out_t[:, :B].T


def network_anomaly_detector_forward(x, params, *, batch_tile=32768, compute_dtype=None):
    """MLP forward pass with a Pallas kernel, tiled over the batch axis.

    batch_tile:    target rows per grid step (clamped by the per-generation VMEM budget).
    compute_dtype: optional dtype (e.g. jnp.bfloat16) for the MXU dots; the cast happens
                   inside the kernel, accumulation/bias/ReLU stay f32, output keeps
                   x's dtype.  (Recommended on v5e, where f32 matmuls are multi-pass.)
    """
    B, D = x.shape
    out_dim = params[4].shape[1]
    x_itemsize = jnp.dtype(x.dtype).itemsize
    tile, num_tiles, vmem_limit = _plan(
        B, D, out_dim, x_itemsize, x_itemsize, batch_tile,
        bf16_compute=(compute_dtype is not None and jnp.dtype(compute_dtype).itemsize < x_itemsize),
    )
    return _forward(x, tuple(params), tile=tile, num_tiles=num_tiles,
                    vmem_limit=vmem_limit, compute_dtype=compute_dtype)


def init_params(key, input_dim, num_classes, dtype=jnp.float32):
    """Deterministic init mirroring nn.Linear's U(-1/sqrt(fan_in), 1/sqrt(fan_in))."""
    out3 = 1 if num_classes == 2 else num_classes
    dims = [(input_dim, 64), (64, 32), (32, out3)]
    params = []
    for fan_in, fan_out in dims:
        key, kw, kb = jax.random.split(key, 3)
        bound = 1.0 / (fan_in ** 0.5)
        w = jax.random.uniform(kw, (fan_in, fan_out), dtype, -bound, bound)
        b = jax.random.uniform(kb, (1, fan_out), dtype, -bound, bound)
        params.extend([w, b])
    return tuple(params)


def reference_forward(x, params):
    w1, b1, w2, b2, w3, b3 = params
    h1 = jnp.maximum(x @ w1 + b1, 0.0)
    h2 = jnp.maximum(h1 @ w2 + b2, 0.0)
    return h2 @ w3 + b3


if __name__ == "__main__":
    key = jax.random.PRNGKey(0)
    k_x, k_p = jax.random.split(key)

    batch = 256
    input_dim = 32
    num_classes = 2  # binary -> single output logit, like the PyTorch module

    x = jax.random.normal(k_x, (batch, input_dim), dtype=jnp.float32)
    params = init_params(k_p, input_dim, num_classes)
    ref = reference_forward(x, params)

    # f32 path (single fat tile for this small batch).
    out = jax.block_until_ready(network_anomaly_detector_forward(x, params))
    assert out.shape == (batch, 1), out.shape
    assert jnp.allclose(out, ref, atol=1e-4, rtol=1e-4), "f32 mismatch vs reference"

    # Ragged batch + multi-step parallel grid (exercises the no-pad boundary handling).
    x_odd = x[:237]
    out_odd = jax.block_until_ready(
        network_anomaly_detector_forward(x_odd, params, batch_tile=128))
    assert out_odd.shape == (237, 1), out_odd.shape
    assert jnp.allclose(out_odd, ref[:237], atol=1e-4, rtol=1e-4), "ragged-batch mismatch"

    # bf16 MXU path (cast inside the kernel; f32 accumulate / bias / ReLU).
    out_bf16 = jax.block_until_ready(
        network_anomaly_detector_forward(x, params, compute_dtype=jnp.bfloat16))
    assert out_bf16.shape == (batch, 1), out_bf16.shape
    assert jnp.allclose(out_bf16, ref, atol=1e-1, rtol=1e-1), "bf16 mismatch vs reference"

    # Multi-class head (num_classes=5 -> out_dim=5) through the same transposed-output path.
    params5 = init_params(k_p, input_dim, 5)
    ref5 = reference_forward(x, params5)
    out5 = jax.block_until_ready(network_anomaly_detector_forward(x, params5))
    assert out5.shape == (batch, 5), out5.shape
    assert jnp.allclose(out5, ref5, atol=1e-4, rtol=1e-4), "multiclass mismatch"

    print("KERNEL_OK")
</pallas_src>

<mosaic_0001>
module attributes {stable_mosaic.version = 11 : i64} {
  func.func @_mlp_kernel(%arg0: i32, %arg1: memref<256x32xf32, #tpu.memory_space<vmem>>, %arg2: memref<32x64xf32, #tpu.memory_space<vmem>>, %arg3: memref<1x64xf32, #tpu.memory_space<vmem>>, %arg4: memref<64x32xf32, #tpu.memory_space<vmem>>, %arg5: memref<1x32xf32, #tpu.memory_space<vmem>>, %arg6: memref<1x32xf32, #tpu.memory_space<vmem>>, %arg7: memref<1x1xf32, #tpu.memory_space<vmem>>, %arg8: memref<1x256xf32, #tpu.memory_space<vmem>>) attributes {dimension_semantics = [#tpu.dimension_semantics<parallel>], iteration_bounds = array<i64: 1>, scalar_prefetch = 0 : i64, scratch_operands = 0 : i64, tpu.core_type = #tpu.core_type<tc>, window_params = [{transform_indices = @transform_0, window_bounds = array<i64: 256, 32>}, {pipeline_mode = #tpu.pipeline_mode<synchronous>, transform_indices = @transform_1, window_bounds = array<i64: 32, 64>}, {pipeline_mode = #tpu.pipeline_mode<synchronous>, transform_indices = @transform_2, window_bounds = array<i64: 1, 64>}, {pipeline_mode = #tpu.pipeline_mode<synchronous>, transform_indices = @transform_3, window_bounds = array<i64: 64, 32>}, {pipeline_mode = #tpu.pipeline_mode<synchronous>, transform_indices = @transform_4, window_bounds = array<i64: 1, 32>}, {pipeline_mode = #tpu.pipeline_mode<synchronous>, transform_indices = @transform_5, window_bounds = array<i64: 1, 32>}, {pipeline_mode = #tpu.pipeline_mode<synchronous>, transform_indices = @transform_6, window_bounds = array<i64: 1, 1>}, {transform_indices = @transform_7, window_bounds = array<i64: 1, 256>}]} {
    %c0 = arith.constant 0 : index
    %c0_0 = arith.constant 0 : index
    %0 = vector.load %arg1[%c0, %c0_0] : memref<256x32xf32, #tpu.memory_space<vmem>>, vector<256x32xf32>
    %c0_1 = arith.constant 0 : index
    %c0_2 = arith.constant 0 : index
    %1 = vector.load %arg2[%c0_1, %c0_2] : memref<32x64xf32, #tpu.memory_space<vmem>>, vector<32x64xf32>
    %cst = arith.constant dense<0.000000e+00> : vector<256x64xf32>
    %2 = tpu.matmul %0, %1, %cst {dimension_numbers = #tpu.dot_dimension_numbers<[1], [0], [0], [1], [0, 0, 1, 1], [], []>} : vector<256x32xf32>, vector<32x64xf32>, vector<256x64xf32> -> vector<256x64xf32>
    %c0_3 = arith.constant 0 : index
    %c0_4 = arith.constant 0 : index
    %3 = vector.load %arg3[%c0_3, %c0_4] : memref<1x64xf32, #tpu.memory_space<vmem>>, vector<1x64xf32>
    %4 = vector.broadcast %3 : vector<1x64xf32> to vector<256x64xf32>
    %5 = arith.addf %2, %4 : vector<256x64xf32>
    %cst_5 = arith.constant 0.000000e+00 : f32
    %6 = vector.broadcast %cst_5 : f32 to vector<256x64xf32>
    %7 = arith.maximumf %5, %6 : vector<256x64xf32>
    %c0_6 = arith.constant 0 : index
    %c0_7 = arith.constant 0 : index
    %8 = vector.load %arg4[%c0_6, %c0_7] : memref<64x32xf32, #tpu.memory_space<vmem>>, vector<64x32xf32>
    %cst_8 = arith.constant dense<0.000000e+00> : vector<256x32xf32>
    %9 = tpu.matmul %7, %8, %cst_8 {dimension_numbers = #tpu.dot_dimension_numbers<[1], [0], [0], [1], [0, 0, 1, 1], [], []>} : vector<256x64xf32>, vector<64x32xf32>, vector<256x32xf32> -> vector<256x32xf32>
    %c0_9 = arith.constant 0 : index
    %c0_10 = arith.constant 0 : index
    %10 = vector.load %arg5[%c0_9, %c0_10] : memref<1x32xf32, #tpu.memory_space<vmem>>, vector<1x32xf32>
    %11 = vector.broadcast %10 : vector<1x32xf32> to vector<256x32xf32>
    %12 = arith.addf %9, %11 : vector<256x32xf32>
    %cst_11 = arith.constant 0.000000e+00 : f32
    %13 = vector.broadcast %cst_11 : f32 to vector<256x32xf32>
    %14 = arith.maximumf %12, %13 : vector<256x32xf32>
    %c0_12 = arith.constant 0 : index
    %c0_13 = arith.constant 0 : index
    %15 = vector.load %arg6[%c0_12, %c0_13] : memref<1x32xf32, #tpu.memory_space<vmem>>, vector<1x32xf32>
    %cst_14 = arith.constant dense<0.000000e+00> : vector<1x256xf32>
    %16 = tpu.matmul %15, %14, %cst_14 {dimension_numbers = #tpu.dot_dimension_numbers<[1], [1], [0], [0], [0, 0, 1, 0], [], []>} : vector<1x32xf32>, vector<256x32xf32>, vector<1x256xf32> -> vector<1x256xf32>
    %c0_15 = arith.constant 0 : index
    %c0_16 = arith.constant 0 : index
    %17 = vector.load %arg7[%c0_15, %c0_16] : memref<1x1xf32, #tpu.memory_space<vmem>>, vector<1x1xf32>
    %18 = vector.broadcast %17 : vector<1x1xf32> to vector<1x256xf32>
    %19 = arith.addf %16, %18 : vector<1x256xf32>
    %c0_17 = arith.constant 0 : index
    %c0_18 = arith.constant 0 : index
    %20 = vector.load %arg8[%c0_17, %c0_18] : memref<1x256xf32, #tpu.memory_space<vmem>>, vector<1x256xf32>
    tpu.vector_store %arg8[%c0_17, %c0_18], %19 {strides = array<i32>} : memref<1x256xf32, #tpu.memory_space<vmem>>, vector<1x256xf32>,
    return
  }
  func.func @transform_0(%arg0: i32) -> (i32, i32) {
    %c0_i32 = arith.constant 0 : i32
    %c0_i32_0 = arith.constant 0 : i32
    return %arg0, %c0_i32 : i32, i32
  }
  func.func @transform_1(%arg0: i32) -> (i32, i32) {
    %c0_i32 = arith.constant 0 : i32
    %c0_i32_0 = arith.constant 0 : i32
    %c0_i32_1 = arith.constant 0 : i32
    return %c0_i32, %c0_i32_0 : i32, i32
  }
  func.func @transform_2(%arg0: i32) -> (i32, i32) {
    %c0_i32 = arith.constant 0 : i32
    %c0_i32_0 = arith.constant 0 : i32
    %c0_i32_1 = arith.constant 0 : i32
    return %c0_i32, %c0_i32_0 : i32, i32
  }
  func.func @transform_3(%arg0: i32) -> (i32, i32) {
    %c0_i32 = arith.constant 0 : i32
    %c0_i32_0 = arith.constant 0 : i32
    %c0_i32_1 = arith.constant 0 : i32
    return %c0_i32, %c0_i32_0 : i32, i32
  }
  func.func @transform_4(%arg0: i32) -> (i32, i32) {
    %c0_i32 = arith.constant 0 : i32
    %c0_i32_0 = arith.constant 0 : i32
    %c0_i32_1 = arith.constant 0 : i32
    return %c0_i32, %c0_i32_0 : i32, i32
  }
  func.func @transform_5(%arg0: i32) -> (i32, i32) {
    %c0_i32 = arith.constant 0 : i32
    %c0_i32_0 = arith.constant 0 : i32
    %c0_i32_1 = arith.constant 0 : i32
    return %c0_i32, %c0_i32_0 : i32, i32
  }
  func.func @transform_6(%arg0: i32) -> (i32, i32) {
    %c0_i32 = arith.constant 0 : i32
    %c0_i32_0 = arith.constant 0 : i32
    %c0_i32_1 = arith.constant 0 : i32
    return %c0_i32, %c0_i32_0 : i32, i32
  }
  func.func @transform_7(%arg0: i32) -> (i32, i32) {
    %c0_i32 = arith.constant 0 : i32
    %c0_i32_0 = arith.constant 0 : i32
    return %c0_i32, %arg0 : i32, i32
  }
}

</mosaic_0001>

<llo_original>
// kernel: _forward.1
$region0: #{_forward.1}
  #allocation0 [shape = 'u32[]', space=smem, size = 0x4, offset = 0x4, fixed_abs, tag = 'smem constant byte address 0x4 - core index']
  #allocation1 [shape = 'u32[144,128]{1,0:T(1,128)}', space=vmem, size = 0x12000, scoped, tag = 'internal scratch']
  #allocation2 [shape = 'f32[1,1]{1,0:T(1,128)S(1)}', space=vmem, size = 0x200, scoped, tag = 'scoped memory for _forward.1']
  %s0 = inlined_call_operand.vmem [shape: f32[256,32], index: 0, kind: input, shape index: {}]
  %s1 = inlined_call_operand.vmem [shape: f32[32,64], index: 1, kind: input, shape index: {}]
  %s2 = inlined_call_operand.vmem [shape: f32[1,64], index: 2, kind: input, shape index: {}]
  %s3 = inlined_call_operand.vmem [shape: f32[64,32], index: 3, kind: input, shape index: {}]
  %s4 = inlined_call_operand.vmem [shape: f32[1,32], index: 4, kind: input, shape index: {}]
  %s5 = inlined_call_operand.vmem [shape: f32[1,32], index: 5, kind: input, shape index: {}]
  %s6 = inlined_call_operand.<no memory space> [shape: f32[1,1], index: 6, kind: input, shape index: {}]
  %s7 = inlined_call_operand.hbm [shape: f32[1,256], index: 7, kind: output, shape index: {}]
  %s8 = sld [smem:[#allocation0]]
  $region38: #{_forward.1} parent=0
    _
  %s10 = ssub.s32 1, %s8
  %s11 = scalar_select 0, %s10, %s8
  %v12 = vstv %s6
  %13 = vst [vmem:[#allocation2] sm:$0x1] %v12
  $region1: #{_forward.1} parent=0
    #allocation3 [shape = 'u8[1024]{0}', space=vmem, size = 0x400, scoped, tag = 'output window, operand 0, single buffered']
    #allocation4 [shape = 's32[1]{0}', space=sflag, size = 0x4, scoped, tag = 'scoped memory for _forward.1']
    %14 = vsyncpa [#allocation4], 0
    // Predicated region
    $region2: #{_forward.1} parent=1 // pred_check
      _
    $region3: #{_forward.1} parent=1 // pred_check_branch
      %16 = sbr.rel (0) target = $region5
    $region4: #{_forward.1} parent=1 // pred_region
      _
    $region5: #{_forward.1} parent=1 // pred_fallthru
      _
    // Predicated region
    $region6: #{_forward.1} parent=1 // pred_check
      _
    $region7: #{_forward.1} parent=1 // pred_check_branch
      %18 = sbr.rel (0) target = $region9
    $region8: #{_forward.1} parent=1 // pred_region
      _
    $region9: #{_forward.1} parent=1 // pred_fallthru
      _
    // Predicated region
    $region10: #{_forward.1} parent=1 // pred_check
      _
    $region11: #{_forward.1} parent=1 // pred_check_branch
      %20 = sbr.rel (0) target = $region13
    $region12: #{_forward.1} parent=1 // pred_region
      _
    $region13: #{_forward.1} parent=1 // pred_fallthru
      _
    // Predicated region
    $region14: #{_forward.1} parent=1 // pred_check
      _
    $region15: #{_forward.1} parent=1 // pred_check_branch
      %22 = sbr.rel (0) target = $region17
    $region16: #{_forward.1} parent=1 // pred_region
      _
    $region17: #{_forward.1} parent=1 // pred_fallthru
      _
    // Predicated region
    $region18: #{_forward.1} parent=1 // pred_check
      _
    $region19: #{_forward.1} parent=1 // pred_check_branch
      %24 = sbr.rel (0) target = $region21
    $region20: #{_forward.1} parent=1 // pred_region
      _
    $region21: #{_forward.1} parent=1 // pred_fallthru
      _
    // Predicated region
    $region22: #{_forward.1} parent=1 // pred_check
      _
    $region23: #{_forward.1} parent=1 // pred_check_branch
      %26 = sbr.rel (0) target = $region25
    $region24: #{_forward.1} parent=1 // pred_region
      _
    $region25: #{_forward.1} parent=1 // pred_fallthru
      _
    // Predicated region
    $region26: #{_forward.1} parent=1 // pred_check
      _
    $region27: #{_forward.1} parent=1 // pred_check_branch
      %28 = sbr.rel (0) target = $region29
    $region28: #{_forward.1} parent=1 // pred_region
      _
    $region29: #{_forward.1} parent=1 // pred_fallthru
      _
    %v29 = vld [vmem:[%s0] sm:$0xff]
    %v30 = vld [vmem:[%s0 + $0x8] sm:$0xff]
    %v31 = vld [vmem:[%s0 + $0x10] sm:$0xff]
    %v32 = vld [vmem:[%s0 + $0x18] sm:$0xff]
    %v33 = vld [vmem:[%s0 + $0x20] sm:$0xff]
    %v34 = vld [vmem:[%s0 + $0x28] sm:$0xff]
    %v35 = vld [vmem:[%s0 + $0x30] sm:$0xff]
    %v36 = vld [vmem:[%s0 + $0x38] sm:$0xff]
    %v37 = vld [vmem:[%s0 + $0x40] sm:$0xff]
    %v38 = vld [vmem:[%s0 + $0x48] sm:$0xff]
    %v39 = vld [vmem:[%s0 + $0x50] sm:$0xff]
    %v40 = vld [vmem:[%s0 + $0x58] sm:$0xff]
    %v41 = vld [vmem:[%s0 + $0x60] sm:$0xff]
    %v42 = vld [vmem:[%s0 + $0x68] sm:$0xff]
    %v43 = vld [vmem:[%s0 + $0x70] sm:$0xff]
    %v44 = vld [vmem:[%s0 + $0x78] sm:$0xff]
    %v45 = vld [vmem:[%s0 + $0x80] sm:$0xff]
    %v46 = vld [vmem:[%s0 + $0x88] sm:$0xff]
    %v47 = vld [vmem:[%s0 + $0x90] sm:$0xff]
    %v48 = vld [vmem:[%s0 + $0x98] sm:$0xff]
    %v49 = vld [vmem:[%s0 + $0xa0] sm:$0xff]
    %v50 = vld [vmem:[%s0 + $0xa8] sm:$0xff]
    %v51 = vld [vmem:[%s0 + $0xb0] sm:$0xff]
    %v52 = vld [vmem:[%s0 + $0xb8] sm:$0xff]
    %v53 = vld [vmem:[%s0 + $0xc0] sm:$0xff]
    %v54 = vld [vmem:[%s0 + $0xc8] sm:$0xff]
    %v55 = vld [vmem:[%s0 + $0xd0] sm:$0xff]
    %v56 = vld [vmem:[%s0 + $0xd8] sm:$0xff]
    %v57 = vld [vmem:[%s0 + $0xe0] sm:$0xff]
    %v58 = vld [vmem:[%s0 + $0xe8] sm:$0xff]
    %v59 = vld [vmem:[%s0 + $0xf0] sm:$0xff]
    %v60 = vld [vmem:[%s0 + $0xf8] sm:$0xff]
    %v61 = vld [vmem:[%s1] sm:$0xff]
    %v62 = vld [vmem:[%s1 + $0x8] sm:$0xff]
    %v63 = vld [vmem:[%s1 + $0x10] sm:$0xff]
    %v64 = vld [vmem:[%s1 + $0x18] sm:$0xff]
    %v65 = vld [vmem:[%s2] sm:$0x1]
    %v67 = vlaneseq
    %v68 = vshrl.u32 %v67, 7
    %v69 = vsub.s32 0, %v68
    %v70 = vrot.slane %v65, %v69
    %vm72 = vcmask 261120
    %v74 = vsel %vm72, %v29, 0
    %v77 = vsel %vm72, %v30, 0
    %v80 = vsel %vm72, %v31, 0
    %v83 = vsel %vm72, %v32, 0
    %v86 = vsel %vm72, %v33, 0
    %v89 = vsel %vm72, %v34, 0
    %v92 = vsel %vm72, %v35, 0
    %v95 = vsel %vm72, %v36, 0
    %v98 = vsel %vm72, %v37, 0
    %v101 = vsel %vm72, %v38, 0
    %v104 = vsel %vm72, %v39, 0
    %v107 = vsel %vm72, %v40, 0
    %v110 = vsel %vm72, %v41, 0
    %v113 = vsel %vm72, %v42, 0
    %v116 = vsel %vm72, %v43, 0
    %v119 = vsel %vm72, %v44, 0
    %v122 = vsel %vm72, %v45, 0
    %v125 = vsel %vm72, %v46, 0
    %v128 = vsel %vm72, %v47, 0
    %v131 = vsel %vm72, %v48, 0
    %v134 = vsel %vm72, %v49, 0
    %v137 = vsel %vm72, %v50, 0
    %v140 = vsel %vm72, %v51, 0
    %v143 = vsel %vm72, %v52, 0
    %v146 = vsel %vm72, %v53, 0
    %v149 = vsel %vm72, %v54, 0
    %v152 = vsel %vm72, %v55, 0
    %v155 = vsel %vm72, %v56, 0
    %v158 = vsel %vm72, %v57, 0
    %v161 = vsel %vm72, %v58, 0
    %v164 = vsel %vm72, %v59, 0
    %v167 = vsel %vm72, %v60, 0
    %169 = vmatprep.subr.mxu0 0.0
    %170 = vmatpush1.msra.mxu0 %v61
    %171 = vmatprep.subr.mxu0 0.0
    %172 = vmatpush1.msra.mxu0 %v62
    %173 = vmatprep.subr.mxu0 0.0
    %174 = vmatpush1.msra.mxu0 %v63
    %175 = vmatprep.subr.mxu0 0.0
    %176 = vmatpush1.msra.mxu0 %v64
    %177 = vmatprep.subr.mxu0 0.0
    %178 = vmatpush1.msra.mxu0 0.0
    %179 = vmatprep.subr.mxu0 0.0
    %180 = vmatpush1.msra.mxu0 0.0
    %181 = vmatprep.subr.mxu0 0.0
    %182 = vmatpush1.msra.mxu0 0.0
    %183 = vmatprep.subr.mxu0 0.0
    %184 = vmatpush1.msra.mxu0 0.0
    %185 = vmatprep.subr.mxu0 0.0
    %186 = vmatpush1.msra.mxu0 0.0
    %187 = vmatprep.subr.mxu0 0.0
    %188 = vmatpush1.msra.mxu0 0.0
    %189 = vmatprep.subr.mxu0 0.0
    %190 = vmatpush1.msra.mxu0 0.0
    %191 = vmatprep.subr.mxu0 0.0
    %192 = vmatpush1.msra.mxu0 0.0
    %193 = vmatprep.subr.mxu0 0.0
    %194 = vmatpush1.msra.mxu0 0.0
    %195 = vmatprep.subr.mxu0 0.0
    %196 = vmatpush1.msra.mxu0 0.0
    %197 = vmatprep.subr.mxu0 0.0
    %198 = vmatpush1.msra.mxu0 0.0
    %199 = vmatprep.subr.mxu0 0.0
    %200 = vmatpush1.msra.mxu0 0.0
    %201 = vmatprep.subr.mxu0 0.0
    %202 = vmatpush1.msra.mxu0 0.0
    %203 = vmatprep.subr.mxu0 0.0
    %204 = vmatpush1.msra.mxu0 0.0
    %205 = vmatprep.subr.mxu0 0.0
    %206 = vmatpush1.msra.mxu0 0.0
    %207 = vmatprep.subr.mxu0 0.0
    %208 = vmatpush1.msra.mxu0 0.0
    %209 = vmatprep.subr.mxu0 0.0
    %210 = vmatpush1.msra.mxu0 0.0
    %211 = vmatprep.subr.mxu0 0.0
    %212 = vmatpush1.msra.mxu0 0.0
    %213 = vmatprep.subr.mxu0 0.0
    %214 = vmatpush1.msra.mxu0 0.0
    %215 = vmatprep.subr.mxu0 0.0
    %216 = vmatpush1.msra.mxu0 0.0
    %217 = vmatprep.subr.mxu0 0.0
    %218 = vmatpush1.msra.mxu0 0.0
    %219 = vmatprep.subr.mxu0 0.0
    %220 = vmatpush1.msra.mxu0 0.0
    %221 = vmatprep.subr.mxu0 0.0
    %222 = vmatpush1.msra.mxu0 0.0
    %223 = vmatprep.subr.mxu0 0.0
    %224 = vmatpush1.msra.mxu0 0.0
    %225 = vmatprep.subr.mxu0 0.0
    %226 = vmatpush1.msra.mxu0 0.0
    %227 = vmatprep.subr.mxu0 0.0
    %228 = vmatpush1.msra.mxu0 0.0
    %229 = vmatprep.subr.mxu0 0.0
    %230 = vmatpush1.msra.mxu0 0.0
    %231 = vmatprep.subr.mxu0 0.0
    %232 = vmatpush1.msra.mxu0 0.0
    %233 = vmatprep.mubr.f32.mxu0 0.0
    %234 = vmatmul.mubr.f32.gmra.mrb[0].mxu0 %v74
    %v235 = vpop.f32.mrb[0].mxu0
    %v236 = vadd.f32 %v70, %v235
    %v237 = vpop.f32.mrb[0].mxu0
    %238 = vmatprep.mubr.f32.mxu0 0.0
    %239 = vmatmul.mubr.f32.gmra.mrb[0].mxu0 %v77
    %v240 = vpop.f32.mrb[0].mxu0
    %v241 = vadd.f32 %v70, %v240
    %v242 = vpop.f32.mrb[0].mxu0
    %243 = vmatprep.mubr.f32.mxu0 0.0
    %244 = vmatmul.mubr.f32.gmra.mrb[0].mxu0 %v80
    %v245 = vpop.f32.mrb[0].mxu0
    %v246 = vadd.f32 %v70, %v245
    %v247 = vpop.f32.mrb[0].mxu0
    %248 = vmatprep.mubr.f32.mxu0 0.0
    %249 = vmatmul.mubr.f32.gmra.mrb[0].mxu0 %v83
    %v250 = vpop.f32.mrb[0].mxu0
    %v251 = vadd.f32 %v70, %v250
    %v252 = vpop.f32.mrb[0].mxu0
    %253 = vmatprep.mubr.f32.mxu0 0.0
    %254 = vmatmul.mubr.f32.gmra.mrb[0].mxu0 %v86
    %v255 = vpop.f32.mrb[0].mxu0
    %v256 = vadd.f32 %v70, %v255
    %v257 = vpop.f32.mrb[0].mxu0
    %258 = vmatprep.mubr.f32.mxu0 0.0
    %259 = vmatmul.mubr.f32.gmra.mrb[0].mxu0 %v89
    %v260 = vpop.f32.mrb[0].mxu0
    %v261 = vadd.f32 %v70, %v260
    %v262 = vpop.f32.mrb[0].mxu0
    %263 = vmatprep.mubr.f32.mxu0 0.0
    %264 = vmatmul.mubr.f32.gmra.mrb[0].mxu0 %v92
    %v265 = vpop.f32.mrb[0].mxu0
    %v266 = vadd.f32 %v70, %v265
    %v267 = vpop.f32.mrb[0].mxu0
    %268 = vmatprep.mubr.f32.mxu0 0.0
    %269 = vmatmul.mubr.f32.gmra.mrb[0].mxu0 %v95
    %v270 = vpop.f32.mrb[0].mxu0
    %v271 = vadd.f32 %v70, %v270
    %v272 = vpop.f32.mrb[0].mxu0
    %273 = vmatprep.mubr.f32.mxu0 0.0
    %274 = vmatmul.mubr.f32.gmra.mrb[0].mxu0 %v98
    %v275 = vpop.f32.mrb[0].mxu0
    %v276 = vadd.f32 %v70, %v275
    %v277 = vpop.f32.mrb[0].mxu0
    %278 = vmatprep.mubr.f32.mxu0 0.0
    %279 = vmatmul.mubr.f32.gmra.mrb[0].mxu0 %v101
    %v280 = vpop.f32.mrb[0].mxu0
    %v281 = vadd.f32 %v70, %v280
    %v282 = vpop.f32.mrb[0].mxu0
    %283 = vmatprep.mubr.f32.mxu0 0.0
    %284 = vmatmul.mubr.f32.gmra.mrb[0].mxu0 %v104
    %v285 = vpop.f32.mrb[0].mxu0
    %v286 = vadd.f32 %v70, %v285
    %v287 = vpop.f32.mrb[0].mxu0
    %288 = vmatprep.mubr.f32.mxu0 0.0
    %289 = vmatmul.mubr.f32.gmra.mrb[0].mxu0 %v107
    %v290 = vpop.f32.mrb[0].mxu0
    %v291 = vadd.f32 %v70, %v290
    %v292 = vpop.f32.mrb[0].mxu0
    %293 = vmatprep.mubr.f32.mxu0 0.0
    %294 = vmatmul.mubr.f32.gmra.mrb[0].mxu0 %v110
    %v295 = vpop.f32.mrb[0].mxu0
    %v296 = vadd.f32 %v70, %v295
    %v297 = vpop.f32.mrb[0].mxu0
    %298 = vmatprep.mubr.f32.mxu0 0.0
    %299 = vmatmul.mubr.f32.gmra.mrb[0].mxu0 %v113
    %v300 = vpop.f32.mrb[0].mxu0
    %v301 = vadd.f32 %v70, %v300
    %v302 = vpop.f32.mrb[0].mxu0
    %303 = vmatprep.mubr.f32.mxu0 0.0
    %304 = vmatmul.mubr.f32.gmra.mrb[0].mxu0 %v116
    %v305 = vpop.f32.mrb[0].mxu0
    %v306 = vadd.f32 %v70, %v305
    %v307 = vpop.f32.mrb[0].mxu0
    %308 = vmatprep.mubr.f32.mxu0 0.0
    %309 = vmatmul.mubr.f32.gmra.mrb[0].mxu0 %v119
    %v310 = vpop.f32.mrb[0].mxu0
    %v311 = vadd.f32 %v70, %v310
    %v312 = vpop.f32.mrb[0].mxu0
    %313 = vmatprep.mubr.f32.mxu0 0.0
    %314 = vmatmul.mubr.f32.gmra.mrb[0].mxu0 %v122
    %v315 = vpop.f32.mrb[0].mxu0
    %v316 = vadd.f32 %v70, %v315
    %v317 = vpop.f32.mrb[0].mxu0
    %318 = vmatprep.mubr.f32.mxu0 0.0
    %319 = vmatmul.mubr.f32.gmra.mrb[0].mxu0 %v125
    %v320 = vpop.f32.mrb[0].mxu0
    %v321 = vadd.f32 %v70, %v320
    %v322 = vpop.f32.mrb[0].mxu0
    %323 = vmatprep.mubr.f32.mxu0 0.0
    %324 = vmatmul.mubr.f32.gmra.mrb[0].mxu0 %v128
    %v325 = vpop.f32.mrb[0].mxu0
    %v326 = vadd.f32 %v70, %v325
    %v327 = vpop.f32.mrb[0].mxu0
    %328 = vmatprep.mubr.f32.mxu0 0.0
    %329 = vmatmul.mubr.f32.gmra.mrb[0].mxu0 %v131
    %v330 = vpop.f32.mrb[0].mxu0
    %v331 = vadd.f32 %v70, %v330
    %v332 = vpop.f32.mrb[0].mxu0
    %333 = vmatprep.mubr.f32.mxu0 0.0
    %334 = vmatmul.mubr.f32.gmra.mrb[0].mxu0 %v134
    %v335 = vpop.f32.mrb[0].mxu0
    %v336 = vadd.f32 %v70, %v335
    %v337 = vpop.f32.mrb[0].mxu0
    %338 = vmatprep.mubr.f32.mxu0 0.0
    %339 = vmatmul.mubr.f32.gmra.mrb[0].mxu0 %v137
    %v340 = vpop.f32.mrb[0].mxu0
    %v341 = vadd.f32 %v70, %v340
    %v342 = vpop.f32.mrb[0].mxu0
    %343 = vmatprep.mubr.f32.mxu0 0.0
    %344 = vmatmul.mubr.f32.gmra.mrb[0].mxu0 %v140
    %v345 = vpop.f32.mrb[0].mxu0
    %v346 = vadd.f32 %v70, %v345
    %v347 = vpop.f32.mrb[0].mxu0
    %348 = vmatprep.mubr.f32.mxu0 0.0
    %349 = vmatmul.mubr.f32.gmra.mrb[0].mxu0 %v143
    %v350 = vpop.f32.mrb[0].mxu0
    %v351 = vadd.f32 %v70, %v350
    %v352 = vpop.f32.mrb[0].mxu0
    %353 = vmatprep.mubr.f32.mxu0 0.0
    %354 = vmatmul.mubr.f32.gmra.mrb[0].mxu0 %v146
    %v355 = vpop.f32.mrb[0].mxu0
    %v356 = vadd.f32 %v70, %v355
    %v357 = vpop.f32.mrb[0].mxu0
    %358 = vmatprep.mubr.f32.mxu0 0.0
    %359 = vmatmul.mubr.f32.gmra.mrb[0].mxu0 %v149
    %v360 = vpop.f32.mrb[0].mxu0
    %v361 = vadd.f32 %v70, %v360
    %v362 = vpop.f32.mrb[0].mxu0
    %363 = vmatprep.mubr.f32.mxu0 0.0
    %364 = vmatmul.mubr.f32.gmra.mrb[0].mxu0 %v152
    %v365 = vpop.f32.mrb[0].mxu0
    %v366 = vadd.f32 %v70, %v365
    %v367 = vpop.f32.mrb[0].mxu0
    %368 = vmatprep.mubr.f32.mxu0 0.0
    %369 = vmatmul.mubr.f32.gmra.mrb[0].mxu0 %v155
    %v370 = vpop.f32.mrb[0].mxu0
    %v371 = vadd.f32 %v70, %v370
    %v372 = vpop.f32.mrb[0].mxu0
    %373 = vmatprep.mubr.f32.mxu0 0.0
    %374 = vmatmul.mubr.f32.gmra.mrb[0].mxu0 %v158
    %v375 = vpop.f32.mrb[0].mxu0
    %v376 = vadd.f32 %v70, %v375
    %v377 = vpop.f32.mrb[0].mxu0
    %378 = vmatprep.mubr.f32.mxu0 0.0
    %379 = vmatmul.mubr.f32.gmra.mrb[0].mxu0 %v161
    %v380 = vpop.f32.mrb[0].mxu0
    %v381 = vadd.f32 %v70, %v380
    %v382 = vpop.f32.mrb[0].mxu0
    %383 = vmatprep.mubr.f32.mxu0 0.0
    %384 = vmatmul.mubr.f32.gmra.mrb[0].mxu0 %v164
    %v385 = vpop.f32.mrb[0].mxu0
    %v386 = vadd.f32 %v70, %v385
    %v387 = vpop.f32.mrb[0].mxu0
    %388 = vmatprep.mubr.f32.mxu0 0.0
    %389 = vmatmul.mubr.f32.gmra.mrb[0].mxu0 %v167
    %v390 = vpop.f32.mrb[0].mxu0
    %v391 = vadd.f32 %v70, %v390
    %v392 = vpop.f32.mrb[0].mxu0
    %393 = vdwg.mxu0
    %v394 = vmax.f32 %v236, 0.0
    %v395 = vmax.f32 %v241, 0.0
    %v396 = vmax.f32 %v246, 0.0
    %v397 = vmax.f32 %v251, 0.0
    %v398 = vmax.f32 %v256, 0.0
    %v399 = vmax.f32 %v261, 0.0
    %v400 = vmax.f32 %v266, 0.0
    %v401 = vmax.f32 %v271, 0.0
    %v402 = vmax.f32 %v276, 0.0
    %v403 = vmax.f32 %v281, 0.0
    %v404 = vmax.f32 %v286, 0.0
    %v405 = vmax.f32 %v291, 0.0
    %v406 = vmax.f32 %v296, 0.0
    %v407 = vmax.f32 %v301, 0.0
    %v408 = vmax.f32 %v306, 0.0
    %v409 = vmax.f32 %v311, 0.0
    %v410 = vmax.f32 %v316, 0.0
    %v411 = vmax.f32 %v321, 0.0
    %v412 = vmax.f32 %v326, 0.0
    %v413 = vmax.f32 %v331, 0.0
    %v414 = vmax.f32 %v336, 0.0
    %v415 = vmax.f32 %v341, 0.0
    %v416 = vmax.f32 %v346, 0.0
    %v417 = vmax.f32 %v351, 0.0
    %v418 = vmax.f32 %v356, 0.0
    %v419 = vmax.f32 %v361, 0.0
    %v420 = vmax.f32 %v366, 0.0
    %v421 = vmax.f32 %v371, 0.0
    %v422 = vmax.f32 %v376, 0.0
    %v423 = vmax.f32 %v381, 0.0
    %v424 = vmax.f32 %v386, 0.0
    %v425 = vmax.f32 %v391, 0.0
    %v426 = vld [vmem:[%s3] sm:$0xff]
    %v427 = vld [vmem:[%s3 + $0x8] sm:$0xff]
    %v428 = vld [vmem:[%s3 + $0x10] sm:$0xff]
    %v429 = vld [vmem:[%s3 + $0x18] sm:$0xff]
    %v430 = vld [vmem:[%s3 + $0x20] sm:$0xff]
    %v431 = vld [vmem:[%s3 + $0x28] sm:$0xff]
    %v432 = vld [vmem:[%s3 + $0x30] sm:$0xff]
    %v433 = vld [vmem:[%s3 + $0x38] sm:$0xff]
    %v434 = vld [vmem:[%s4] sm:$0x1]
    %v436 = vlaneseq
    %v437 = vshrl.u32 %v436, 7
    %v438 = vsub.s32 0, %v437
    %v439 = vrot.slane %v434, %v438
    %vm441 = vcmask 523264
    %v443 = vsel %vm441, %v394, 0
    %v446 = vsel %vm441, %v395, 0
    %v449 = vsel %vm441, %v396, 0
    %v452 = vsel %vm441, %v397, 0
    %v455 = vsel %vm441, %v398, 0
    %v458 = vsel %vm441, %v399, 0
    %v461 = vsel %vm441, %v400, 0
    %v464 = vsel %vm441, %v401, 0
    %v467 = vsel %vm441, %v402, 0
    %v470 = vsel %vm441, %v403, 0
    %v473 = vsel %vm441, %v404, 0
    %v476 = vsel %vm441, %v405, 0
    %v479 = vsel %vm441, %v406, 0
    %v482 = vsel %vm441, %v407, 0
    %v485 = vsel %vm441, %v408, 0
    %v488 = vsel %vm441, %v409, 0
    %v491 = vsel %vm441, %v410, 0
    %v494 = vsel %vm441, %v411, 0
    %v497 = vsel %vm441, %v412, 0
    %v500 = vsel %vm441, %v413, 0
    %v503 = vsel %vm441, %v414, 0
    %v506 = vsel %vm441, %v415, 0
    %v509 = vsel %vm441, %v416, 0
    %v512 = vsel %vm441, %v417, 0
    %v515 = vsel %vm441, %v418, 0
    %v518 = vsel %vm441, %v419, 0
    %v521 = vsel %vm441, %v420, 0
    %v524 = vsel %vm441, %v421, 0
    %v527 = vsel %vm441, %v422, 0
    %v530 = vsel %vm441, %v423, 0
    %v533 = vsel %vm441, %v424, 0
    %v536 = vsel %vm441, %v425, 0
    %538 = vmatprep.subr.mxu0 0.0
    %539 = vmatpush1.msra.mxu0 %v426
    %540 = vmatprep.subr.mxu0 0.0
    %541 = vmatpush1.msra.mxu0 %v427
    %542 = vmatprep.subr.mxu0 0.0
    %543 = vmatpush1.msra.mxu0 %v428
    %544 = vmatprep.subr.mxu0 0.0
    %545 = vmatpush1.msra.mxu0 %v429
    %546 = vmatprep.subr.mxu0 0.0
    %547 = vmatpush1.msra.mxu0 %v430
    %548 = vmatprep.subr.mxu0 0.0
    %549 = vmatpush1.msra.mxu0 %v431
    %550 = vmatprep.subr.mxu0 0.0
    %551 = vmatpush1.msra.mxu0 %v432
    %552 = vmatprep.subr.mxu0 0.0
    %553 = vmatpush1.msra.mxu0 %v433
    %554 = vmatprep.subr.mxu0 0.0
    %555 = vmatpush1.msra.mxu0 0.0
    %556 = vmatprep.subr.mxu0 0.0
    %557 = vmatpush1.msra.mxu0 0.0
    %558 = vmatprep.subr.mxu0 0.0
    %559 = vmatpush1.msra.mxu0 0.0
    %560 = vmatprep.subr.mxu0 0.0
    %561 = vmatpush1.msra.mxu0 0.0
    %562 = vmatprep.subr.mxu0 0.0
    %563 = vmatpush1.msra.mxu0 0.0
    %564 = vmatprep.subr.mxu0 0.0
    %565 = vmatpush1.msra.mxu0 0.0
    %566 = vmatprep.subr.mxu0 0.0
    %567 = vmatpush1.msra.mxu0 0.0
    %568 = vmatprep.subr.mxu0 0.0
    %569 = vmatpush1.msra.mxu0 0.0
    %570 = vmatprep.subr.mxu0 0.0
    %571 = vmatpush1.msra.mxu0 0.0
    %572 = vmatprep.subr.mxu0 0.0
    %573 = vmatpush1.msra.mxu0 0.0
    %574 = vmatprep.subr.mxu0 0.0
    %575 = vmatpush1.msra.mxu0 0.0
    %576 = vmatprep.subr.mxu0 0.0
    %577 = vmatpush1.msra.mxu0 0.0
    %578 = vmatprep.subr.mxu0 0.0
    %579 = vmatpush1.msra.mxu0 0.0
    %580 = vmatprep.subr.mxu0 0.0
    %581 = vmatpush1.msra.mxu0 0.0
    %582 = vmatprep.subr.mxu0 0.0
    %583 = vmatpush1.msra.mxu0 0.0
    %584 = vmatprep.subr.mxu0 0.0
    %585 = vmatpush1.msra.mxu0 0.0
    %586 = vmatprep.subr.mxu0 0.0
    %587 = vmatpush1.msra.mxu0 0.0
    %588 = vmatprep.subr.mxu0 0.0
    %589 = vmatpush1.msra.mxu0 0.0
    %590 = vmatprep.subr.mxu0 0.0
    %591 = vmatpush1.msra.mxu0 0.0
    %592 = vmatprep.subr.mxu0 0.0
    %593 = vmatpush1.msra.mxu0 0.0
    %594 = vmatprep.subr.mxu0 0.0
    %595 = vmatpush1.msra.mxu0 0.0
    %596 = vmatprep.subr.mxu0 0.0
    %597 = vmatpush1.msra.mxu0 0.0
    %598 = vmatprep.subr.mxu0 0.0
    %599 = vmatpush1.msra.mxu0 0.0
    %600 = vmatprep.subr.mxu0 0.0
    %601 = vmatpush1.msra.mxu0 0.0
    %602 = vmatprep.mubr.f32.mxu0 0.0
    %603 = vmatmul.mubr.f32.gmra.mrb[0].mxu0 %v443
    %v604 = vpop.f32.mrb[0].mxu0
    %v605 = vadd.f32 %v439, %v604
    %v606 = vpop.f32.mrb[0].mxu0
    %607 = vmatprep.mubr.f32.mxu0 0.0
    %608 = vmatmul.mubr.f32.gmra.mrb[0].mxu0 %v446
    %v609 = vpop.f32.mrb[0].mxu0
    %v610 = vadd.f32 %v439, %v609
    %v611 = vpop.f32.mrb[0].mxu0
    %612 = vmatprep.mubr.f32.mxu0 0.0
    %613 = vmatmul.mubr.f32.gmra.mrb[0].mxu0 %v449
    %v614 = vpop.f32.mrb[0].mxu0
    %v615 = vadd.f32 %v439, %v614
    %v616 = vpop.f32.mrb[0].mxu0
    %617 = vmatprep.mubr.f32.mxu0 0.0
    %618 = vmatmul.mubr.f32.gmra.mrb[0].mxu0 %v452
    %v619 = vpop.f32.mrb[0].mxu0
    %v620 = vadd.f32 %v439, %v619
    %v621 = vpop.f32.mrb[0].mxu0
    %622 = vmatprep.mubr.f32.mxu0 0.0
    %623 = vmatmul.mubr.f32.gmra.mrb[0].mxu0 %v455
    %v624 = vpop.f32.mrb[0].mxu0
    %v625 = vadd.f32 %v439, %v624
    %v626 = vpop.f32.mrb[0].mxu0
    %627 = vmatprep.mubr.f32.mxu0 0.0
    %628 = vmatmul.mubr.f32.gmra.mrb[0].mxu0 %v458
    %v629 = vpop.f32.mrb[0].mxu0
    %v630 = vadd.f32 %v439, %v629
    %v631 = vpop.f32.mrb[0].mxu0
    %632 = vmatprep.mubr.f32.mxu0 0.0
    %633 = vmatmul.mubr.f32.gmra.mrb[0].mxu0 %v461
    %v634 = vpop.f32.mrb[0].mxu0
    %v635 = vadd.f32 %v439, %v634
    %v636 = vpop.f32.mrb[0].mxu0
    %637 = vmatprep.mubr.f32.mxu0 0.0
    %638 = vmatmul.mubr.f32.gmra.mrb[0].mxu0 %v464
    %v639 = vpop.f32.mrb[0].mxu0
    %v640 = vadd.f32 %v439, %v639
    %v641 = vpop.f32.mrb[0].mxu0
    %642 = vmatprep.mubr.f32.mxu0 0.0
    %643 = vmatmul.mubr.f32.gmra.mrb[0].mxu0 %v467
    %v644 = vpop.f32.mrb[0].mxu0
    %v645 = vadd.f32 %v439, %v644
    %v646 = vpop.f32.mrb[0].mxu0
    %647 = vmatprep.mubr.f32.mxu0 0.0
    %648 = vmatmul.mubr.f32.gmra.mrb[0].mxu0 %v470
    %v649 = vpop.f32.mrb[0].mxu0
    %v650 = vadd.f32 %v439, %v649
    %v651 = vpop.f32.mrb[0].mxu0
    %652 = vmatprep.mubr.f32.mxu0 0.0
    %653 = vmatmul.mubr.f32.gmra.mrb[0].mxu0 %v473
    %v654 = vpop.f32.mrb[0].mxu0
    %v655 = vadd.f32 %v439, %v654
    %v656 = vpop.f32.mrb[0].mxu0
    %657 = vmatprep.mubr.f32.mxu0 0.0
    %658 = vmatmul.mubr.f32.gmra.mrb[0].mxu0 %v476
    %v659 = vpop.f32.mrb[0].mxu0
    %v660 = vadd.f32 %v439, %v659
    %v661 = vpop.f32.mrb[0].mxu0
    %662 = vmatprep.mubr.f32.mxu0 0.0
    %663 = vmatmul.mubr.f32.gmra.mrb[0].mxu0 %v479
    %v664 = vpop.f32.mrb[0].mxu0
    %v665 = vadd.f32 %v439, %v664
    %v666 = vpop.f32.mrb[0].mxu0
    %667 = vmatprep.mubr.f32.mxu0 0.0
    %668 = vmatmul.mubr.f32.gmra.mrb[0].mxu0 %v482
    %v669 = vpop.f32.mrb[0].mxu0
    %v670 = vadd.f32 %v439, %v669
    %v671 = vpop.f32.mrb[0].mxu0
    %672 = vmatprep.mubr.f32.mxu0 0.0
    %673 = vmatmul.mubr.f32.gmra.mrb[0].mxu0 %v485
    %v674 = vpop.f32.mrb[0].mxu0
    %v675 = vadd.f32 %v439, %v674
    %v676 = vpop.f32.mrb[0].mxu0
    %677 = vmatprep.mubr.f32.mxu0 0.0
    %678 = vmatmul.mubr.f32.gmra.mrb[0].mxu0 %v488
    %v679 = vpop.f32.mrb[0].mxu0
    %v680 = vadd.f32 %v439, %v679
    %v681 = vpop.f32.mrb[0].mxu0
    %682 = vmatprep.mubr.f32.mxu0 0.0
    %683 = vmatmul.mubr.f32.gmra.mrb[0].mxu0 %v491
    %v684 = vpop.f32.mrb[0].mxu0
    %v685 = vadd.f32 %v439, %v684
    %v686 = vpop.f32.mrb[0].mxu0
    %687 = vmatprep.mubr.f32.mxu0 0.0
    %688 = vmatmul.mubr.f32.gmra.mrb[0].mxu0 %v494
    %v689 = vpop.f32.mrb[0].mxu0
    %v690 = vadd.f32 %v439, %v689
    %v691 = vpop.f32.mrb[0].mxu0
    %692 = vmatprep.mubr.f32.mxu0 0.0
    %693 = vmatmul.mubr.f32.gmra.mrb[0].mxu0 %v497
    %v694 = vpop.f32.mrb[0].mxu0
    %v695 = vadd.f32 %v439, %v694
    %v696 = vpop.f32.mrb[0].mxu0
    %697 = vmatprep.mubr.f32.mxu0 0.0
    %698 = vmatmul.mubr.f32.gmra.mrb[0].mxu0 %v500
    %v699 = vpop.f32.mrb[0].mxu0
    %v700 = vadd.f32 %v439, %v699
    %v701 = vpop.f32.mrb[0].mxu0
    %702 = vmatprep.mubr.f32.mxu0 0.0
    %703 = vmatmul.mubr.f32.gmra.mrb[0].mxu0 %v503
    %v704 = vpop.f32.mrb[0].mxu0
    %v705 = vadd.f32 %v439, %v704
    %v706 = vpop.f32.mrb[0].mxu0
    %707 = vmatprep.mubr.f32.mxu0 0.0
    %708 = vmatmul.mubr.f32.gmra.mrb[0].mxu0 %v506
    %v709 = vpop.f32.mrb[0].mxu0
    %v710 = vadd.f32 %v439, %v709
    %v711 = vpop.f32.mrb[0].mxu0
    %712 = vmatprep.mubr.f32.mxu0 0.0
    %713 = vmatmul.mubr.f32.gmra.mrb[0].mxu0 %v509
    %v714 = vpop.f32.mrb[0].mxu0
    %v715 = vadd.f32 %v439, %v714
    %v716 = vpop.f32.mrb[0].mxu0
    %717 = vmatprep.mubr.f32.mxu0 0.0
    %718 = vmatmul.mubr.f32.gmra.mrb[0].mxu0 %v512
    %v719 = vpop.f32.mrb[0].mxu0
    %v720 = vadd.f32 %v439, %v719
    %v721 = vpop.f32.mrb[0].mxu0
    %722 = vmatprep.mubr.f32.mxu0 0.0
    %723 = vmatmul.mubr.f32.gmra.mrb[0].mxu0 %v515
    %v724 = vpop.f32.mrb[0].mxu0
    %v725 = vadd.f32 %v439, %v724
    %v726 = vpop.f32.mrb[0].mxu0
    %727 = vmatprep.mubr.f32.mxu0 0.0
    %728 = vmatmul.mubr.f32.gmra.mrb[0].mxu0 %v518
    %v729 = vpop.f32.mrb[0].mxu0
    %v730 = vadd.f32 %v439, %v729
    %v731 = vpop.f32.mrb[0].mxu0
    %732 = vmatprep.mubr.f32.mxu0 0.0
    %733 = vmatmul.mubr.f32.gmra.mrb[0].mxu0 %v521
    %v734 = vpop.f32.mrb[0].mxu0
    %v735 = vadd.f32 %v439, %v734
    %v736 = vpop.f32.mrb[0].mxu0
    %737 = vmatprep.mubr.f32.mxu0 0.0
    %738 = vmatmul.mubr.f32.gmra.mrb[0].mxu0 %v524
    %v739 = vpop.f32.mrb[0].mxu0
    %v740 = vadd.f32 %v439, %v739
    %v741 = vpop.f32.mrb[0].mxu0
    %742 = vmatprep.mubr.f32.mxu0 0.0
    %743 = vmatmul.mubr.f32.gmra.mrb[0].mxu0 %v527
    %v744 = vpop.f32.mrb[0].mxu0
    %v745 = vadd.f32 %v439, %v744
    %v746 = vpop.f32.mrb[0].mxu0
    %747 = vmatprep.mubr.f32.mxu0 0.0
    %748 = vmatmul.mubr.f32.gmra.mrb[0].mxu0 %v530
    %v749 = vpop.f32.mrb[0].mxu0
    %v750 = vadd.f32 %v439, %v749
    %v751 = vpop.f32.mrb[0].mxu0
    %752 = vmatprep.mubr.f32.mxu0 0.0
    %753 = vmatmul.mubr.f32.gmra.mrb[0].mxu0 %v533
    %v754 = vpop.f32.mrb[0].mxu0
    %v755 = vadd.f32 %v439, %v754
    %v756 = vpop.f32.mrb[0].mxu0
    %757 = vmatprep.mubr.f32.mxu0 0.0
    %758 = vmatmul.mubr.f32.gmra.mrb[0].mxu0 %v536
    %v759 = vpop.f32.mrb[0].mxu0
    %v760 = vadd.f32 %v439, %v759
    %v761 = vpop.f32.mrb[0].mxu0
    %762 = vdwg.mxu0
    %v763 = vmax.f32 %v605, 0.0
    %v764 = vmax.f32 %v610, 0.0
    %v765 = vmax.f32 %v615, 0.0
    %v766 = vmax.f32 %v620, 0.0
    %v767 = vmax.f32 %v625, 0.0
    %v768 = vmax.f32 %v630, 0.0
    %v769 = vmax.f32 %v635, 0.0
    %v770 = vmax.f32 %v640, 0.0
    %v771 = vmax.f32 %v645, 0.0
    %v772 = vmax.f32 %v650, 0.0
    %v773 = vmax.f32 %v655, 0.0
    %v774 = vmax.f32 %v660, 0.0
    %v775 = vmax.f32 %v665, 0.0
    %v776 = vmax.f32 %v670, 0.0
    %v777 = vmax.f32 %v675, 0.0
    %v778 = vmax.f32 %v680, 0.0
    %v779 = vmax.f32 %v685, 0.0
    %v780 = vmax.f32 %v690, 0.0
    %v781 = vmax.f32 %v695, 0.0
    %v782 = vmax.f32 %v700, 0.0
    %v783 = vmax.f32 %v705, 0.0
    %v784 = vmax.f32 %v710, 0.0
    %v785 = vmax.f32 %v715, 0.0
    %v786 = vmax.f32 %v720, 0.0
    %v787 = vmax.f32 %v725, 0.0
    %v788 = vmax.f32 %v730, 0.0
    %v789 = vmax.f32 %v735, 0.0
    %v790 = vmax.f32 %v740, 0.0
    %v791 = vmax.f32 %v745, 0.0
    %v792 = vmax.f32 %v750, 0.0
    %v793 = vmax.f32 %v755, 0.0
    %v794 = vmax.f32 %v760, 0.0
    %v795 = vld [vmem:[%s5] sm:$0x1]
    %v796 = vld [vmem:[#allocation2] sm:$0x1]
    %798 = vset.pattern.permute.xlu0 0
    %799 = vperm.xlu0 %798, %v796
    %v800 = vpop.permute.xlu0 %799
    %v802 = vlaneseq
    %v803 = vshrl.u32 %v802, 7
    %v804 = vsub.s32 0, %v803
    %v805 = vrot.slane %v800, %v804
    %v807 = vsel %vm72, %v795, 0
    %v810 = vsel %vm72, %v763, 0
    %v813 = vsel %vm72, %v764, 0
    %v816 = vsel %vm72, %v765, 0
    %v819 = vsel %vm72, %v766, 0
    %v822 = vsel %vm72, %v767, 0
    %v825 = vsel %vm72, %v768, 0
    %v828 = vsel %vm72, %v769, 0
    %v831 = vsel %vm72, %v770, 0
    %v834 = vsel %vm72, %v771, 0
    %v837 = vsel %vm72, %v772, 0
    %v840 = vsel %vm72, %v773, 0
    %v843 = vsel %vm72, %v774, 0
    %v846 = vsel %vm72, %v775, 0
    %v849 = vsel %vm72, %v776, 0
    %v852 = vsel %vm72, %v777, 0
    %v855 = vsel %vm72, %v778, 0
    %v858 = vsel %vm72, %v779, 0
    %v861 = vsel %vm72, %v780, 0
    %v864 = vsel %vm72, %v781, 0
    %v867 = vsel %vm72, %v782, 0
    %v870 = vsel %vm72, %v783, 0
    %v873 = vsel %vm72, %v784, 0
    %v876 = vsel %vm72, %v785, 0
    %v879 = vsel %vm72, %v786, 0
    %v882 = vsel %vm72, %v787, 0
    %v885 = vsel %vm72, %v788, 0
    %v888 = vsel %vm72, %v789, 0
    %v891 = vsel %vm72, %v790, 0
    %v894 = vsel %vm72, %v791, 0
    %v897 = vsel %vm72, %v792, 0
    %v900 = vsel %vm72, %v793, 0
    %v903 = vsel %vm72, %v794, 0
    %905 = vmatprep.subr.mxu0 0.0
    %906 = vmatpush1.xpose.msra.mxu0 %v810
    %907 = vmatprep.subr.mxu0 0.0
    %908 = vmatpush1.xpose.msra.mxu0 %v813
    %909 = vmatprep.subr.mxu0 0.0
    %910 = vmatpush1.xpose.msra.mxu0 %v816
    %911 = vmatprep.subr.mxu0 0.0
    %912 = vmatpush1.xpose.msra.mxu0 %v819
    %913 = vmatprep.subr.mxu0 0.0
    %914 = vmatpush1.xpose.msra.mxu0 %v822
    %915 = vmatprep.subr.mxu0 0.0
    %916 = vmatpush1.xpose.msra.mxu0 %v825
    %917 = vmatprep.subr.mxu0 0.0
    %918 = vmatpush1.xpose.msra.mxu0 %v828
    %919 = vmatprep.subr.mxu0 0.0
    %920 = vmatpush1.xpose.msra.mxu0 %v831
    %921 = vmatprep.subr.mxu0 0.0
    %922 = vmatpush1.xpose.msra.mxu0 %v834
    %923 = vmatprep.subr.mxu0 0.0
    %924 = vmatpush1.xpose.msra.mxu0 %v837
    %925 = vmatprep.subr.mxu0 0.0
    %926 = vmatpush1.xpose.msra.mxu0 %v840
    %927 = vmatprep.subr.mxu0 0.0
    %928 = vmatpush1.xpose.msra.mxu0 %v843
    %929 = vmatprep.subr.mxu0 0.0
    %930 = vmatpush1.xpose.msra.mxu0 %v846
    %931 = vmatprep.subr.mxu0 0.0
    %932 = vmatpush1.xpose.msra.mxu0 %v849
    %933 = vmatprep.subr.mxu0 0.0
    %934 = vmatpush1.xpose.msra.mxu0 %v852
    %935 = vmatprep.subr.mxu0 0.0
    %936 = vmatpush1.xpose.msra.mxu0 %v855
    %937 = vmatprep.subr.mxu0 0.0
    %938 = vmatpush1.xpose.msra.mxu0 %v858
    %939 = vmatprep.subr.mxu0 0.0
    %940 = vmatpush1.xpose.msra.mxu0 %v861
    %941 = vmatprep.subr.mxu0 0.0
    %942 = vmatpush1.xpose.msra.mxu0 %v864
    %943 = vmatprep.subr.mxu0 0.0
    %944 = vmatpush1.xpose.msra.mxu0 %v867
    %945 = vmatprep.subr.mxu0 0.0
    %946 = vmatpush1.xpose.msra.mxu0 %v870
    %947 = vmatprep.subr.mxu0 0.0
    %948 = vmatpush1.xpose.msra.mxu0 %v873
    %949 = vmatprep.subr.mxu0 0.0
    %950 = vmatpush1.xpose.msra.mxu0 %v876
    %951 = vmatprep.subr.mxu0 0.0
    %952 = vmatpush1.xpose.msra.mxu0 %v879
    %953 = vmatprep.subr.mxu0 0.0
    %954 = vmatpush1.xpose.msra.mxu0 %v882
    %955 = vmatprep.subr.mxu0 0.0
    %956 = vmatpush1.xpose.msra.mxu0 %v885
    %957 = vmatprep.subr.mxu0 0.0
    %958 = vmatpush1.xpose.msra.mxu0 %v888
    %959 = vmatprep.subr.mxu0 0.0
    %960 = vmatpush1.xpose.msra.mxu0 %v891
    %961 = vmatprep.subr.mxu0 0.0
    %962 = vmatpush1.xpose.msra.mxu0 %v894
    %963 = vmatprep.subr.mxu0 0.0
    %964 = vmatpush1.xpose.msra.mxu0 %v897
    %965 = vmatprep.subr.mxu0 0.0
    %966 = vmatpush1.xpose.msra.mxu0 %v900
    %967 = vmatprep.subr.mxu0 0.0
    %968 = vmatpush1.xpose.msra.mxu0 %v903
    %969 = vmatprep.mubr.f32.mxu0 0.0
    %970 = vmatmul.mubr.f32.gmra.mrb[0].mxu0 %v807
    %v971 = vpop.f32.mrb[0].mxu0
    %v972 = vadd.f32 %v805, %v971
    %v973 = vpop.f32.mrb[0].mxu0
    %v974 = vadd.f32 %v805, %v973
    %975 = vdwg.mxu0
    %v978 = vcombine.low %v972, %v974
    %v980 = vunpack.c.l.s4 1966171168
    %v981 = vunpack.c.0.s8 %v980
    %v982 = vlaneseq
    %v983 = vshrl.u32 %v982, 7
    %v984 = vsub.s32 %v981, %v983
    %v985 = vrot.slane %v978, %v984
    %v987 = vunpack.c.l.s4 1966171168
    %v988 = vunpack.c.0.s8 %v987
    %v989 = vlaneseq
    %v990 = vshrl.u32 %v989, 7
    %v991 = vsub.s32 %v988, %v990
    %v992 = vrot.slane %v985, %v991
    %v994 = vlaneseq
    %vm995 = vcmp.ge.s32.totalorder %v994, 0
    %vm996 = vcmp.lt.s32.totalorder %v994, 256
    %vm997 = vmand %vm995, %vm996
    %998 = vst.msk [vmem:[#allocation3] sm:$0x3] %vm997, %v992
    // Predicated region
    $region30: #{_forward.1} parent=1 // pred_check
      _
    $region31: #{_forward.1} parent=1 // pred_check_branch
      %1000 = sbr.rel (0) target = $region33
    $region32: #{_forward.1} parent=1 // pred_region
      %s1002 = ssub.s32 32, 32
      %1003 = vsyncadd [#allocation4], %s1002
      %s1005 = sshll.u32 [#allocation3], 4
      %s1006 = int_to_ptr.vmem [resolvable:$true] %s1005
      %1008 = dma.vmem_to_hbm [thread:$0]  %s1006, 32, %s7, [#allocation4]
    $region33: #{_forward.1} parent=1 // pred_fallthru
      _
    // Predicated region
    $region34: #{_forward.1} parent=1 // pred_check
      _
    $region35: #{_forward.1} parent=1 // pred_check_branch
      %1010 = sbr.rel (0) target = $region37
    $region36: #{_forward.1} parent=1 // pred_region
      %1011 = dma.done [#allocation4], 32
    $region37: #{_forward.1} parent=1 // pred_fallthru
      _
    %1012 = vsyncpa [#allocation4], 1

</llo_original>
